<compile_context>
chip_gen: v7x
topology: tpu7x:2x2x1
jax: 0.10.0
libtpu: 0.0.40
codegen_flags: <defaults>
</compile_context>

<pallas_src>
import functools
import math

import jax
import jax.numpy as jnp
from jax import lax
from jax.experimental import pallas as pl
from jax.experimental.pallas import tpu as pltpu


def _i32(v):
    """Python int -> wrapped int32 constant (allows 0x8xxxxxxx hash constants)."""
    v &= 0xFFFFFFFF
    if v >= 0x80000000:
        v -= 0x100000000
    return jnp.int32(v)


def make_pe_table(max_len: int, d_model: int, dtype=jnp.float32) -> jnp.ndarray:
    """Sinusoidal positional-encoding table, shape (max_len, d_model)."""
    position = jnp.arange(max_len, dtype=jnp.float32)[:, None]          # (L, 1)
    div_term = jnp.exp(
        jnp.arange(0, d_model, 2, dtype=jnp.float32)
        * (-math.log(10000.0) / d_model)
    )                                                                    # (D/2,)
    args = position * div_term                                           # (L, D/2)
    # interleave sin/cos -> pe[:, 0::2] = sin, pe[:, 1::2] = cos
    pe = jnp.stack([jnp.sin(args), jnp.cos(args)], axis=-1).reshape(max_len, d_model)
    return pe.astype(dtype)


# -------------------- kernels --------------------

def _pe_add_kernel(x_ref, pe_ref, o_ref):
    # Plain 2-D add: (tile_rows, cols) + (tile_rows, cols). Batch broadcast is
    # handled by the pe BlockSpec index_map, not in-kernel.
    o_ref[...] = x_ref[...] + pe_ref[...]


def _pe_add_dropout_kernel(seed_ref, x_ref, pe_ref, o_ref, *, p):
    # Inverted dropout with scale 1/(1-p). RNG stream differs from torch's, but
    # keep-probability / scaling semantics match.
    y = x_ref[...] + pe_ref[...]
    rows, cols = o_ref.shape

    # Global element index -> mask is identical regardless of tiling, and
    # different tiles automatically get uncorrelated bits.
    r = lax.broadcasted_iota(jnp.int32, (rows, cols), 0) + pl.program_id(0) * rows
    c = lax.broadcasted_iota(jnp.int32, (rows, cols), 1) + pl.program_id(1) * cols
    idx = r * (pl.num_programs(1) * cols) + c

    # Counter-based hash (splitmix-style mix + lowbias32 finalizer), int32 ops
    # with logical shifts only — lowers on TPU Mosaic and in interpret mode.
    h = idx * _i32(0x9E3779B9) + seed_ref[0] * _i32(0x85EBCA6B)
    h = h ^ lax.shift_right_logical(h, jnp.int32(16))
    h = h * _i32(0x7FEB352D)
    h = h ^ lax.shift_right_logical(h, jnp.int32(15))
    h = h * _i32(0x846CA68B)
    h = h ^ lax.shift_right_logical(h, jnp.int32(16))

    # Integer-domain keep compare on the top 24 bits: P(keep) = 1 - p.
    u24 = lax.shift_right_logical(h, jnp.int32(8))
    keep = u24 >= jnp.int32(int(round(p * (1 << 24))))

    scale = jnp.asarray(1.0 / (1.0 - p), dtype=y.dtype)   # stay in x dtype
    o_ref[...] = jnp.where(keep, y * scale, jnp.zeros_like(y))


# -------------------- wrapper --------------------

def _pick_tile_rows(n_rows, row_bytes, vmem_budget_bytes=8 * 1024 * 1024):
    # ~6 tile-sized live buffers per step (double-buffered x, out, pe).
    max_rows = max(8, vmem_budget_bytes // (6 * max(1, row_bytes)))
    tile = int(min(n_rows, max_rows))
    if tile < n_rows:
        tile = max(8, (tile // 8) * 8)   # keep sublane dim a multiple of 8
    return tile


def positional_encoding_forward(x, pe_table, *, dropout_p=0.1,
                                training=False, seed=0, tile_rows=None):
    """x: (S, B, D). Returns dropout(x + pe[:S]) (dropout only if training)."""
    S, B, D = x.shape
    pe = pe_table[:S].astype(x.dtype)      # (S, D); cast once (setup, not hot path)
    x2 = x.reshape(S, B * D)               # free view: merge trailing dims

    if D % 128 == 0:
        # Lane-aligned d_model: the flattened column axis is split into B
        # blocks of width D; the same pe block is reused for every batch block
        # via the index_map (zero-cost broadcast, pe stays resident in VMEM).
        pe2 = pe                            # (S, D)
        n_col_blocks, col_block = B, D
    else:
        # Small / unaligned d_model (demo: D=32): flatten batch into lanes for
        # a lane-dense output slab and tile pe across batch once in the wrapper.
        pe2 = jnp.tile(pe, (1, B))          # (S, B*D)
        n_col_blocks, col_block = 1, B * D

    if tile_rows is None:
        tile_rows = _pick_tile_rows(S, col_block * x2.dtype.itemsize)
    grid = (pl.cdiv(S, tile_rows), n_col_blocks)

    # index_maps take (*grid_indices, *scalar_prefetch_refs); *_ absorbs the
    # optional seed ref in the dropout path.
    x_spec = pl.BlockSpec((tile_rows, col_block), lambda i, b, *_: (i, b))
    pe_spec = pl.BlockSpec((tile_rows, col_block), lambda i, b, *_: (i, 0))
    out_spec = pl.BlockSpec((tile_rows, col_block), lambda i, b, *_: (i, b))

    compiler_params = pltpu.CompilerParams(
        dimension_semantics=("parallel", "parallel"),
        vmem_limit_bytes=32 * 1024 * 1024)
    out_shape = jax.ShapeDtypeStruct((S, B * D), x.dtype)

    if (not training) or dropout_p == 0.0:
        out2 = pl.pallas_call(
            _pe_add_kernel,
            out_shape=out_shape,
            grid_spec=pltpu.PrefetchScalarGridSpec(
                num_scalar_prefetch=0,
                grid=grid,
                in_specs=[x_spec, pe_spec],
                out_specs=out_spec),
            compiler_params=compiler_params,
        )(x2, pe2)
        return out2.reshape(S, B, D)

    seed_arr = jnp.asarray([seed], dtype=jnp.int32)
    kernel = functools.partial(_pe_add_dropout_kernel, p=float(dropout_p))
    out2 = pl.pallas_call(
        kernel,
        out_shape=out_shape,
        grid_spec=pltpu.PrefetchScalarGridSpec(
            num_scalar_prefetch=1,
            grid=grid,
            in_specs=[x_spec, pe_spec],
            out_specs=out_spec),
        compiler_params=compiler_params,
    )(seed_arr, x2, pe2)
    return out2.reshape(S, B, D)


if __name__ == "__main__":
    d_model = 32
    max_len = 5000
    seq_len = 8
    batch = 2
    dropout_p = 0.1

    key = jax.random.PRNGKey(0)
    x = jax.random.normal(key, (seq_len, batch, d_model), dtype=jnp.float32)
    pe_table = make_pe_table(max_len, d_model)
    ref = x + pe_table[:seq_len][:, None, :]

    # --- eval mode (dropout = identity): exact match against reference ---
    out_eval = jax.block_until_ready(
        positional_encoding_forward(x, pe_table, dropout_p=dropout_p,
                                    training=False))
    assert out_eval.shape == x.shape and out_eval.dtype == x.dtype
    assert jnp.allclose(out_eval, ref, atol=1e-5, rtol=1e-5)

    # --- training mode: inverted dropout via in-kernel hash PRNG ---
    out_train = jax.block_until_ready(
        positional_encoding_forward(x, pe_table, dropout_p=dropout_p,
                                    training=True, seed=1234))
    assert out_train.shape == x.shape and out_train.dtype == x.dtype
    # every surviving element equals ref / (1 - p); dropped elements are 0
    kept = out_train != 0
    assert jnp.allclose(jnp.where(kept, out_train, 0.0),
                        jnp.where(kept, ref / (1.0 - dropout_p), 0.0),
                        atol=1e-5, rtol=1e-5)
    drop_frac = float(1.0 - jnp.mean(kept.astype(jnp.float32)))
    assert 0.0 < drop_frac < 0.4   # loose sanity check around p = 0.1

    print("KERNEL_OK")
</pallas_src>

<mosaic_0001>
module attributes {stable_mosaic.version = 11 : i64} {
  func.func @_pe_add_kernel(%arg0: i32, %arg1: i32, %arg2: memref<8x64xf32, #tpu.memory_space<vmem>>, %arg3: memref<8x64xf32, #tpu.memory_space<vmem>>, %arg4: memref<8x64xf32, #tpu.memory_space<vmem>>) attributes {dimension_semantics = [#tpu.dimension_semantics<parallel>, #tpu.dimension_semantics<parallel>], iteration_bounds = array<i64: 1, 1>, scalar_prefetch = 0 : i64, scratch_operands = 0 : i64, tpu.core_type = #tpu.core_type<tc>, window_params = [{transform_indices = @transform_0, window_bounds = array<i64: 8, 64>}, {transform_indices = @transform_1, window_bounds = array<i64: 8, 64>}, {transform_indices = @transform_2, window_bounds = array<i64: 8, 64>}]} {
    %c0 = arith.constant 0 : index
    %c0_0 = arith.constant 0 : index
    %0 = vector.load %arg2[%c0, %c0_0] : memref<8x64xf32, #tpu.memory_space<vmem>>, vector<8x64xf32>
    %c0_1 = arith.constant 0 : index
    %c0_2 = arith.constant 0 : index
    %1 = vector.load %arg3[%c0_1, %c0_2] : memref<8x64xf32, #tpu.memory_space<vmem>>, vector<8x64xf32>
    %2 = arith.addf %0, %1 : vector<8x64xf32>
    %c0_3 = arith.constant 0 : index
    %c0_4 = arith.constant 0 : index
    %3 = vector.load %arg4[%c0_3, %c0_4] : memref<8x64xf32, #tpu.memory_space<vmem>>, vector<8x64xf32>
    tpu.vector_store %arg4[%c0_3, %c0_4], %2 {strides = array<i32>} : memref<8x64xf32, #tpu.memory_space<vmem>>, vector<8x64xf32>,
    return
  }
  func.func @transform_0(%arg0: i32, %arg1: i32) -> (i32, i32) {
    %c0_i32 = arith.constant 0 : i32
    return %arg0, %arg1 : i32, i32
  }
  func.func @transform_1(%arg0: i32, %arg1: i32) -> (i32, i32) {
    %c0_i32 = arith.constant 0 : i32
    %c0_i32_0 = arith.constant 0 : i32
    return %arg0, %c0_i32 : i32, i32
  }
  func.func @transform_2(%arg0: i32, %arg1: i32) -> (i32, i32) {
    %c0_i32 = arith.constant 0 : i32
    return %arg0, %arg1 : i32, i32
  }
}

</mosaic_0001>

<llo_original>
// kernel: tpu_custom_call.1
$region0: #{tpu_custom_call.1}
  #allocation0 [shape = 'u32[]', space=smem, size = 0x4, offset = 0x4, fixed_abs, tag = 'smem constant byte address 0x4 - core index']
  #allocation1 [shape = 'u32[144,128]{1,0:T(1,128)}', space=vmem, size = 0x12000, scoped, tag = 'internal scratch']
  %s0 = inlined_call_operand.hbm [shape: f32[8,64], index: 0, kind: input, shape index: {}]
  %s1 = inlined_call_operand.hbm [shape: f32[8,64], index: 1, kind: input, shape index: {}]
  %s2 = inlined_call_operand.hbm [shape: f32[8,64], index: 2, kind: output, shape index: {}]
  %s3 = sld [smem:[#allocation0]]
  $region26: #{tpu_custom_call.1} parent=0
    _
  %s5 = ssub.s32 1, %s3
  %s6 = scalar_select 0, %s5, %s3
  $region1: #{tpu_custom_call.1} parent=0
    #allocation2 [shape = 'u8[4096]{0}', space=vmem, size = 0x1000, scoped, tag = 'input window, operand 0, single buffered']
    #allocation3 [shape = 's32[1]{0}', space=sflag, size = 0x4, scoped, tag = 'scoped memory for tpu_custom_call.1']
    #allocation4 [shape = 's32[1]{0}', space=sflag, size = 0x4, scoped, tag = 'scoped memory for tpu_custom_call.1']
    #allocation5 [shape = 'u8[4096]{0}', space=vmem, size = 0x1000, scoped, tag = 'input window, operand 1, single buffered']
    #allocation6 [shape = 's32[1]{0}', space=sflag, size = 0x4, scoped, tag = 'scoped memory for tpu_custom_call.1']
    #allocation7 [shape = 'u8[4096]{0}', space=vmem, size = 0x1000, scoped, tag = 'output window, operand 0, single buffered']
    %7 = vsyncpa [#allocation3], 0
    %8 = vsyncpa [#allocation6], 0
    %9 = vsyncpa [#allocation4], 0
    // Predicated region
    $region2: #{tpu_custom_call.1} parent=1 // pred_check
      _
    $region3: #{tpu_custom_call.1} parent=1 // pred_check_branch
      %11 = sbr.rel (0) target = $region5
    $region4: #{tpu_custom_call.1} parent=1 // pred_region
      %s13 = ssub.s32 128, 128
      %14 = vsyncadd [#allocation3], %s13
      %s16 = sshll.u32 [#allocation2], 4
      %s17 = int_to_ptr.vmem [resolvable:$true] %s16
      %19 = dma.hbm_to_vmem [thread:$0]  %s0, 128, %s17, [#allocation3]
    $region5: #{tpu_custom_call.1} parent=1 // pred_fallthru
      _
    // Predicated region
    $region6: #{tpu_custom_call.1} parent=1 // pred_check
      _
    $region7: #{tpu_custom_call.1} parent=1 // pred_check_branch
      %21 = sbr.rel (0) target = $region9
    $region8: #{tpu_custom_call.1} parent=1 // pred_region
      %s23 = ssub.s32 128, 128
      %24 = vsyncadd [#allocation6], %s23
      %s26 = sshll.u32 [#allocation5], 4
      %s27 = int_to_ptr.vmem [resolvable:$true] %s26
      %29 = dma.hbm_to_vmem [thread:$0]  %s1, 128, %s27, [#allocation6]
    $region9: #{tpu_custom_call.1} parent=1 // pred_fallthru
      _
    // Predicated region
    $region10: #{tpu_custom_call.1} parent=1 // pred_check
      _
    $region11: #{tpu_custom_call.1} parent=1 // pred_check_branch
      %31 = sbr.rel (0) target = $region13
    $region12: #{tpu_custom_call.1} parent=1 // pred_region
      %32 = dma.done [#allocation3], 128
    $region13: #{tpu_custom_call.1} parent=1 // pred_fallthru
      _
    // Predicated region
    $region14: #{tpu_custom_call.1} parent=1 // pred_check
      _
    $region15: #{tpu_custom_call.1} parent=1 // pred_check_branch
      %34 = sbr.rel (0) target = $region17
    $region16: #{tpu_custom_call.1} parent=1 // pred_region
      %35 = dma.done [#allocation6], 128
    $region17: #{tpu_custom_call.1} parent=1 // pred_fallthru
      _
    %v36 = vld [vmem:[#allocation2] sm:$0xff]
    %v37 = vld [vmem:[#allocation5] sm:$0xff]
    %v38 = vadd.f32 %v36, %v37
    %vm39 = vcmask 523264
    %40 = vst.msk [vmem:[#allocation7] sm:$0xff] %vm39, %v38
    // Predicated region
    $region18: #{tpu_custom_call.1} parent=1 // pred_check
      _
    $region19: #{tpu_custom_call.1} parent=1 // pred_check_branch
      %42 = sbr.rel (0) target = $region21
    $region20: #{tpu_custom_call.1} parent=1 // pred_region
      %s44 = ssub.s32 128, 128
      %45 = vsyncadd [#allocation4], %s44
      %s47 = sshll.u32 [#allocation7], 4
      %s48 = int_to_ptr.vmem [resolvable:$true] %s47
      %50 = dma.vmem_to_hbm [thread:$0]  %s48, 128, %s2, [#allocation4]
    $region21: #{tpu_custom_call.1} parent=1 // pred_fallthru
      _
    // Predicated region
    $region22: #{tpu_custom_call.1} parent=1 // pred_check
      _
    $region23: #{tpu_custom_call.1} parent=1 // pred_check_branch
      %52 = sbr.rel (0) target = $region25
    $region24: #{tpu_custom_call.1} parent=1 // pred_region
      %53 = dma.done [#allocation4], 128
    $region25: #{tpu_custom_call.1} parent=1 // pred_fallthru
      _
    %54 = vsyncpa [#allocation3], 1
    %55 = vsyncpa [#allocation6], 1
    %56 = vsyncpa [#allocation4], 1

</llo_original>
